<compile_context>
chip_gen: v7x
topology: tpu7x:2x2x1
jax: 0.10.0
libtpu: 0.0.40
codegen_flags: <defaults>
</compile_context>

<pallas_src>
import functools

import jax
import jax.numpy as jnp
from jax.experimental import pallas as pl
from jax.experimental.pallas import tpu as pltpu

EPS = 1e-5  # matches nn.LayerNorm default


def _round_up(a, m):
    return (a + m - 1) // m * m


def _make_kernel(vt):
    """Kernel factory; vt (vocab tile width, multiple of 128) is closed over."""

    def kernel(x_ref, w_ref, b_ref, o_ref, xn_scr, m_scr, l_scr):
        j = pl.program_id(1)

        # --- once per row tile: LayerNorm (affine folded into W / b host-side) ---
        @pl.when(j == 0)
        def _init():
            x = x_ref[...].astype(jnp.float32)
            mean = jnp.mean(x, axis=-1, keepdims=True)
            cent = x - mean
            var = jnp.mean(cent * cent, axis=-1, keepdims=True)  # population var (PyTorch LN)
            xn_scr[...] = (cent * jax.lax.rsqrt(var + EPS)).astype(xn_scr.dtype)
            m_scr[...] = jnp.full(m_scr.shape, -jnp.inf, dtype=m_scr.dtype)
            l_scr[...] = jnp.zeros(l_scr.shape, dtype=l_scr.dtype)

        col = pl.multiple_of(j * vt, 128)

        # --- per vocab tile: bf16 MXU matmul with f32 accumulation ---
        logits = jnp.dot(xn_scr[...], w_ref[...], preferred_element_type=jnp.float32)
        logits = logits + b_ref[:, pl.ds(col, vt)]  # bias is fully resident, f32

        # Write the unnormalized logits straight into the resident output block.
        o_ref[:, pl.ds(col, vt)] = logits.astype(o_ref.dtype)

        # --- streaming (online) log-sum-exp statistics ---
        m_old = m_scr[...]
        m_new = jnp.maximum(m_old, jnp.max(logits, axis=-1, keepdims=True))
        l_scr[...] = (l_scr[...] * jnp.exp(m_old - m_new)
                      + jnp.sum(jnp.exp(logits - m_new), axis=-1, keepdims=True))
        m_scr[...] = m_new

        # --- finalize: in-place normalize the whole resident output block ---
        @pl.when(j == pl.num_programs(1) - 1)
        def _fin():
            lse = m_scr[...] + jnp.log(l_scr[...])
            o_ref[...] = (o_ref[...].astype(jnp.float32) - lse).astype(o_ref.dtype)

    return kernel


def fold_generator_params(w, b, gamma, beta, *, vocab_tile=1024):
    """Fold the LayerNorm affine into the linear layer and pre-pad/cast the weight.

    ((x-mu)/sigma*g + be) @ W + b == ((x-mu)/sigma) @ (g[:,None]*W) + (be@W + b)

    Call ONCE (e.g. jit at init time) and reuse the result across forward
    calls — doing it per call re-reads/rewrites the full D*V weight in HBM.
    Returns (w_bf16_padded, bias_f32_padded(1, V_pad), voc_size, vocab_tile_eff).
    """
    D, V = w.shape
    wf = gamma.astype(jnp.float32)[:, None] * w.astype(jnp.float32)
    bf = beta.astype(jnp.float32) @ w.astype(jnp.float32) + b.astype(jnp.float32)

    vt = min(vocab_tile, _round_up(V, 128))
    v_pad = _round_up(V, vt)

    w_bf16 = wf.astype(jnp.bfloat16)
    if v_pad != V:
        w_bf16 = jnp.pad(w_bf16, ((0, 0), (0, v_pad - V)))
        # Large negative bias on padded vocab columns (kept in f32) -> exp
        # underflows to 0, so padding never perturbs the softmax statistics.
        bf = jnp.pad(bf, (0, v_pad - V), constant_values=-1e30)
    return w_bf16, bf.reshape(1, v_pad), V, vt


def _auto_vmem_bytes(row_tile, D, vt, v_pad, x_itemsize, out_itemsize, xn_itemsize):
    x_blk = 2 * row_tile * D * x_itemsize          # double-buffered input rows
    w_blk = 2 * D * vt * 2                         # double-buffered bf16 weight tile
    b_blk = 2 * v_pad * 4                          # resident f32 bias
    o_blk = 2 * row_tile * v_pad * out_itemsize    # resident output block (double-buffered)
    scr = row_tile * D * xn_itemsize + 4 * row_tile * 4
    total = int((x_blk + w_blk + b_blk + o_blk + scr) * 1.25) + (2 << 20)
    return min(max(total, 16 << 20), 128 << 20)


def generator_apply(x, w_folded, b_folded, voc_size, vocab_tile, *,
                    row_tile=256, out_dtype=jnp.bfloat16, vmem_limit_bytes=None):
    """x: (B, S, D); (w_folded, b_folded, voc_size, vocab_tile) from
    fold_generator_params. Returns log-probs (B, S, voc_size)."""
    B, S, D = x.shape
    v_pad = w_folded.shape[1]
    vt = vocab_tile
    assert v_pad % vt == 0
    num_j = v_pad // vt

    rows = B * S
    # Row tile: multiple of 8 (f32 sublanes), no larger than the padded row count.
    row_tile = _round_up(min(row_tile, _round_up(rows, 8)), 8)
    rows_pad = _round_up(rows, row_tile)

    x2 = x.reshape(rows, D)
    if rows_pad != rows:
        x2 = jnp.pad(x2, ((0, rows_pad - rows), (0, 0)))

    # Tiny decode batches: keep normalized activations in f32 (an 8-row bf16
    # tile half-fills vregs / badly underfills the MXU anyway).
    xn_dtype = jnp.bfloat16 if row_tile >= 16 else jnp.float32

    if vmem_limit_bytes is None:
        vmem_limit_bytes = _auto_vmem_bytes(
            row_tile, D, vt, v_pad, x2.dtype.itemsize,
            jnp.dtype(out_dtype).itemsize, jnp.dtype(xn_dtype).itemsize)

    grid = (rows_pad // row_tile, num_j)

    out = pl.pallas_call(
        _make_kernel(vt),
        out_shape=jax.ShapeDtypeStruct((rows_pad, v_pad), out_dtype),
        grid_spec=pltpu.PrefetchScalarGridSpec(
            num_scalar_prefetch=0,
            grid=grid,
            in_specs=[
                pl.BlockSpec((row_tile, D), lambda i, j: (i, 0)),   # x rows (held across j)
                pl.BlockSpec((D, vt), lambda i, j: (0, j)),         # weight streams over V
                pl.BlockSpec((1, v_pad), lambda i, j: (0, 0)),      # bias fully resident
            ],
            out_specs=pl.BlockSpec((row_tile, v_pad), lambda i, j: (i, 0)),
            scratch_shapes=[
                pltpu.VMEM((row_tile, D), xn_dtype),   # normalized activations
                pltpu.VMEM((row_tile, 1), jnp.float32),  # running max
                pltpu.VMEM((row_tile, 1), jnp.float32),  # running sum
            ],
        ),
        compiler_params=pltpu.CompilerParams(
            dimension_semantics=("parallel", "arbitrary"),
            vmem_limit_bytes=vmem_limit_bytes,
        ),
    )(x2, w_folded, b_folded)

    return out[:rows, :voc_size].reshape(B, S, voc_size)


def generator_forward(x, w, b, gamma, beta, *, row_tile=256, vocab_tile=1024,
                      out_dtype=jnp.bfloat16, vmem_limit_bytes=None):
    """One-shot convenience wrapper. For repeated calls with fixed weights,
    cache fold_generator_params() and call generator_apply() directly."""
    wf, bf, V, vt = fold_generator_params(w, b, gamma, beta, vocab_tile=vocab_tile)
    return generator_apply(x, wf, bf, V, vt, row_tile=row_tile,
                           out_dtype=out_dtype, vmem_limit_bytes=vmem_limit_bytes)


def generator_reference(x, w, b, gamma, beta):
    xf = x.astype(jnp.float32)
    mean = jnp.mean(xf, axis=-1, keepdims=True)
    var = jnp.mean((xf - mean) ** 2, axis=-1, keepdims=True)
    xn = (xf - mean) * jax.lax.rsqrt(var + EPS) * gamma + beta
    logits = xn @ w.astype(jnp.float32) + b
    return jax.nn.log_softmax(logits, axis=-1)


if __name__ == "__main__":
    # Small shapes consistent with the module: x (B, Sc, Dc) -> (B, S, V).
    # Tile choices exercise multiple row tiles AND multiple vocab tiles (the
    # streaming log-softmax path + the in-place output normalization).
    B, S, D, V = 2, 16, 32, 256

    key = jax.random.PRNGKey(0)
    kx, kw, kb, kg, kbe = jax.random.split(key, 5)

    x = jax.random.normal(kx, (B, S, D), dtype=jnp.float32)
    w = jax.random.normal(kw, (D, V), dtype=jnp.float32) * (1.0 / jnp.sqrt(D))
    b = jax.random.normal(kb, (V,), dtype=jnp.float32) * 0.01
    gamma = 1.0 + 0.1 * jax.random.normal(kg, (D,), dtype=jnp.float32)
    beta = 0.1 * jax.random.normal(kbe, (D,), dtype=jnp.float32)

    ref = generator_reference(x, w, b, gamma, beta)

    # Fold once, reuse (the production pattern).
    wf, bf, voc, vt = fold_generator_params(w, b, gamma, beta, vocab_tile=128)

    # (1) f32 output path, multi-tile grid: 2 row tiles x 2 vocab tiles.
    out = generator_apply(x, wf, bf, voc, vt, row_tile=16, out_dtype=jnp.float32)
    out = jax.block_until_ready(out)
    assert out.shape == (B, S, V)
    assert bool(jnp.all(jnp.isfinite(out)))
    assert jnp.allclose(out, ref, atol=5e-2, rtol=5e-2)
    assert jnp.allclose(jnp.sum(jnp.exp(out), axis=-1), 1.0, atol=2e-2)

    # (2) default fast path: bf16 output, default (clamped) tiles.
    out_bf = generator_forward(x, w, b, gamma, beta)
    out_bf = jax.block_until_ready(out_bf)
    assert out_bf.shape == (B, S, V)
    assert out_bf.dtype == jnp.bfloat16
    assert bool(jnp.all(jnp.isfinite(out_bf.astype(jnp.float32))))
    assert jnp.allclose(out_bf.astype(jnp.float32), ref, atol=2e-1, rtol=5e-2)
    assert jnp.allclose(jnp.sum(jnp.exp(out_bf.astype(jnp.float32)), axis=-1), 1.0, atol=5e-2)

    print("KERNEL_OK")
</pallas_src>

<mosaic_0001>
module attributes {stable_mosaic.version = 11 : i64} {
  func.func @kernel(%arg0: i32, %arg1: i32, %arg2: memref<16x32xf32, #tpu.memory_space<vmem>>, %arg3: memref<32x128xbf16, #tpu.memory_space<vmem>>, %arg4: memref<1x256xf32, #tpu.memory_space<vmem>>, %arg5: memref<16x256xf32, #tpu.memory_space<vmem>>, %arg6: memref<16x32xbf16, #tpu.memory_space<vmem>>, %arg7: memref<16x1xf32, #tpu.memory_space<vmem>>, %arg8: memref<16x1xf32, #tpu.memory_space<vmem>>) attributes {dimension_semantics = [#tpu.dimension_semantics<parallel>, #tpu.dimension_semantics<arbitrary>], iteration_bounds = array<i64: 2, 2>, scalar_prefetch = 0 : i64, scratch_operands = 3 : i64, tpu.core_type = #tpu.core_type<tc>, window_params = [{transform_indices = @transform_0, window_bounds = array<i64: 16, 32>}, {transform_indices = @transform_1, window_bounds = array<i64: 32, 128>}, {pipeline_mode = #tpu.pipeline_mode<synchronous>, transform_indices = @transform_2, window_bounds = array<i64: 1, 256>}, {transform_indices = @transform_3, window_bounds = array<i64: 16, 256>}]} {
    %c0_i32 = arith.constant 0 : i32
    %0 = arith.cmpi eq, %arg1, %c0_i32 : i32
    %1 = arith.extui %0 : i1 to i32
    %c0_i32_0 = arith.constant 0 : i32
    %2 = arith.cmpi ne, %1, %c0_i32_0 : i32
    scf.if %2 {
      %c0_17 = arith.constant 0 : index
      %c0_18 = arith.constant 0 : index
      %33 = vector.load %arg2[%c0_17, %c0_18] : memref<16x32xf32, #tpu.memory_space<vmem>>, vector<16x32xf32>
      %cst_19 = arith.constant dense<0.000000e+00> : vector<16xf32>
      %34 = vector.multi_reduction <add>, %33, %cst_19 [1] : vector<16x32xf32> to vector<16xf32>
      %35 = vector.shape_cast %34 : vector<16xf32> to vector<16x1xf32>
      %cst_20 = arith.constant 3.200000e+01 : f32
      %36 = vector.broadcast %cst_20 : f32 to vector<16x1xf32>
      %37 = arith.divf %35, %36 : vector<16x1xf32>
      %38 = vector.broadcast %37 : vector<16x1xf32> to vector<16x32xf32>
      %39 = arith.subf %33, %38 : vector<16x32xf32>
      %40 = arith.mulf %39, %39 : vector<16x32xf32>
      %cst_21 = arith.constant dense<0.000000e+00> : vector<16xf32>
      %41 = vector.multi_reduction <add>, %40, %cst_21 [1] : vector<16x32xf32> to vector<16xf32>
      %42 = vector.shape_cast %41 : vector<16xf32> to vector<16x1xf32>
      %cst_22 = arith.constant 3.200000e+01 : f32
      %43 = vector.broadcast %cst_22 : f32 to vector<16x1xf32>
      %44 = arith.divf %42, %43 : vector<16x1xf32>
      %cst_23 = arith.constant 9.99999974E-6 : f32
      %45 = vector.broadcast %cst_23 : f32 to vector<16x1xf32>
      %46 = arith.addf %44, %45 : vector<16x1xf32>
      %47 = math.rsqrt %46 : vector<16x1xf32>
      %48 = vector.broadcast %47 : vector<16x1xf32> to vector<16x32xf32>
      %49 = arith.mulf %39, %48 : vector<16x32xf32>
      %50 = arith.truncf %49 : vector<16x32xf32> to vector<16x32xbf16>
      %c0_24 = arith.constant 0 : index
      %c0_25 = arith.constant 0 : index
      %51 = vector.load %arg6[%c0_24, %c0_25] : memref<16x32xbf16, #tpu.memory_space<vmem>>, vector<16x32xbf16>
      tpu.vector_store %arg6[%c0_24, %c0_25], %50 {strides = array<i32>} : memref<16x32xbf16, #tpu.memory_space<vmem>>, vector<16x32xbf16>,
      %cst_26 = arith.constant 0xFF800000 : f32
      %52 = vector.broadcast %cst_26 : f32 to vector<16x1xf32>
      %c0_27 = arith.constant 0 : index
      %c0_28 = arith.constant 0 : index
      %53 = vector.load %arg7[%c0_27, %c0_28] : memref<16x1xf32, #tpu.memory_space<vmem>>, vector<16x1xf32>
      tpu.vector_store %arg7[%c0_27, %c0_28], %52 {strides = array<i32>} : memref<16x1xf32, #tpu.memory_space<vmem>>, vector<16x1xf32>,
      %cst_29 = arith.constant 0.000000e+00 : f32
      %54 = vector.broadcast %cst_29 : f32 to vector<16x1xf32>
      %c0_30 = arith.constant 0 : index
      %c0_31 = arith.constant 0 : index
      %55 = vector.load %arg8[%c0_30, %c0_31] : memref<16x1xf32, #tpu.memory_space<vmem>>, vector<16x1xf32>
      tpu.vector_store %arg8[%c0_30, %c0_31], %54 {strides = array<i32>} : memref<16x1xf32, #tpu.memory_space<vmem>>, vector<16x1xf32>,
    } else {
    }
    %c128_i32 = arith.constant 128 : i32
    %3 = arith.muli %arg1, %c128_i32 : i32
    %4 = tpu.assume_multiple %3, 128 : i32
    %c0 = arith.constant 0 : index
    %c0_1 = arith.constant 0 : index
    %5 = vector.load %arg6[%c0, %c0_1] : memref<16x32xbf16, #tpu.memory_space<vmem>>, vector<16x32xbf16>
    %c0_2 = arith.constant 0 : index
    %c0_3 = arith.constant 0 : index
    %6 = vector.load %arg3[%c0_2, %c0_3] : memref<32x128xbf16, #tpu.memory_space<vmem>>, vector<32x128xbf16>
    %cst = arith.constant dense<0.000000e+00> : vector<16x128xf32>
    %7 = tpu.matmul %5, %6, %cst {dimension_numbers = #tpu.dot_dimension_numbers<[1], [0], [0], [1], [0, 0, 1, 1], [], []>} : vector<16x32xbf16>, vector<32x128xbf16>, vector<16x128xf32> -> vector<16x128xf32>
    %c0_4 = arith.constant 0 : index
    %8 = arith.index_cast %4 : i32 to index
    %9 = vector.load %arg4[%c0_4, %8] : memref<1x256xf32, #tpu.memory_space<vmem>>, vector<1x128xf32>
    %10 = vector.broadcast %9 : vector<1x128xf32> to vector<16x128xf32>
    %11 = arith.addf %7, %10 : vector<16x128xf32>
    %c0_5 = arith.constant 0 : index
    %12 = arith.index_cast %4 : i32 to index
    %13 = vector.load %arg5[%c0_5, %12] : memref<16x256xf32, #tpu.memory_space<vmem>>, vector<16x128xf32>
    tpu.vector_store %arg5[%c0_5, %12], %11 {strides = array<i32>} : memref<16x256xf32, #tpu.memory_space<vmem>>, vector<16x128xf32>,
    %c0_6 = arith.constant 0 : index
    %c0_7 = arith.constant 0 : index
    %14 = vector.load %arg7[%c0_6, %c0_7] : memref<16x1xf32, #tpu.memory_space<vmem>>, vector<16x1xf32>
    %cst_8 = arith.constant dense<0xFF800000> : vector<16xf32>
    %15 = vector.multi_reduction <maximumf>, %11, %cst_8 [1] : vector<16x128xf32> to vector<16xf32>
    %16 = vector.shape_cast %15 : vector<16xf32> to vector<16x1xf32>
    %17 = arith.maximumf %14, %16 : vector<16x1xf32>
    %c0_9 = arith.constant 0 : index
    %c0_10 = arith.constant 0 : index
    %18 = vector.load %arg8[%c0_9, %c0_10] : memref<16x1xf32, #tpu.memory_space<vmem>>, vector<16x1xf32>
    %19 = arith.subf %14, %17 : vector<16x1xf32>
    %20 = math.exp %19 : vector<16x1xf32>
    %21 = arith.mulf %18, %20 : vector<16x1xf32>
    %22 = vector.broadcast %17 : vector<16x1xf32> to vector<16x128xf32>
    %23 = arith.subf %11, %22 : vector<16x128xf32>
    %24 = math.exp %23 : vector<16x128xf32>
    %cst_11 = arith.constant dense<0.000000e+00> : vector<16xf32>
    %25 = vector.multi_reduction <add>, %24, %cst_11 [1] : vector<16x128xf32> to vector<16xf32>
    %26 = vector.shape_cast %25 : vector<16xf32> to vector<16x1xf32>
    %27 = arith.addf %21, %26 : vector<16x1xf32>
    %c0_12 = arith.constant 0 : index
    %c0_13 = arith.constant 0 : index
    %28 = vector.load %arg8[%c0_12, %c0_13] : memref<16x1xf32, #tpu.memory_space<vmem>>, vector<16x1xf32>
    tpu.vector_store %arg8[%c0_12, %c0_13], %27 {strides = array<i32>} : memref<16x1xf32, #tpu.memory_space<vmem>>, vector<16x1xf32>,
    %c0_14 = arith.constant 0 : index
    %c0_15 = arith.constant 0 : index
    %29 = vector.load %arg7[%c0_14, %c0_15] : memref<16x1xf32, #tpu.memory_space<vmem>>, vector<16x1xf32>
    tpu.vector_store %arg7[%c0_14, %c0_15], %17 {strides = array<i32>} : memref<16x1xf32, #tpu.memory_space<vmem>>, vector<16x1xf32>,
    %c1_i32 = arith.constant 1 : i32
    %30 = arith.cmpi eq, %arg1, %c1_i32 : i32
    %31 = arith.extui %30 : i1 to i32
    %c0_i32_16 = arith.constant 0 : i32
    %32 = arith.cmpi ne, %31, %c0_i32_16 : i32
    scf.if %32 {
      %c0_17 = arith.constant 0 : index
      %c0_18 = arith.constant 0 : index
      %33 = vector.load %arg7[%c0_17, %c0_18] : memref<16x1xf32, #tpu.memory_space<vmem>>, vector<16x1xf32>
      %c0_19 = arith.constant 0 : index
      %c0_20 = arith.constant 0 : index
      %34 = vector.load %arg8[%c0_19, %c0_20] : memref<16x1xf32, #tpu.memory_space<vmem>>, vector<16x1xf32>
      %35 = math.log %34 : vector<16x1xf32>
      %36 = arith.addf %33, %35 : vector<16x1xf32>
      %c0_21 = arith.constant 0 : index
      %c0_22 = arith.constant 0 : index
      %37 = vector.load %arg5[%c0_21, %c0_22] : memref<16x256xf32, #tpu.memory_space<vmem>>, vector<16x256xf32>
      %38 = vector.broadcast %36 : vector<16x1xf32> to vector<16x256xf32>
      %39 = arith.subf %37, %38 : vector<16x256xf32>
      %c0_23 = arith.constant 0 : index
      %c0_24 = arith.constant 0 : index
      %40 = vector.load %arg5[%c0_23, %c0_24] : memref<16x256xf32, #tpu.memory_space<vmem>>, vector<16x256xf32>
      tpu.vector_store %arg5[%c0_23, %c0_24], %39 {strides = array<i32>} : memref<16x256xf32, #tpu.memory_space<vmem>>, vector<16x256xf32>,
    } else {
    }
    return
  }
  func.func @transform_0(%arg0: i32, %arg1: i32) -> (i32, i32) {
    %c0_i32 = arith.constant 0 : i32
    %c0_i32_0 = arith.constant 0 : i32
    return %arg0, %c0_i32 : i32, i32
  }
  func.func @transform_1(%arg0: i32, %arg1: i32) -> (i32, i32) {
    %c0_i32 = arith.constant 0 : i32
    %c0_i32_0 = arith.constant 0 : i32
    return %c0_i32, %arg1 : i32, i32
  }
  func.func @transform_2(%arg0: i32, %arg1: i32) -> (i32, i32) {
    %c0_i32 = arith.constant 0 : i32
    %c0_i32_0 = arith.constant 0 : i32
    %c0_i32_1 = arith.constant 0 : i32
    return %c0_i32, %c0_i32_0 : i32, i32
  }
  func.func @transform_3(%arg0: i32, %arg1: i32) -> (i32, i32) {
    %c0_i32 = arith.constant 0 : i32
    %c0_i32_0 = arith.constant 0 : i32
    return %arg0, %c0_i32 : i32, i32
  }
}

</mosaic_0001>

<llo_original>
// kernel: tpu_custom_call.1
$region0: #{tpu_custom_call.1}
  #allocation0 [shape = 'u32[]', space=smem, size = 0x4, offset = 0x4, fixed_abs, tag = 'smem constant byte address 0x4 - core index']
  #allocation1 [shape = 'u32[144,128]{1,0:T(1,128)}', space=vmem, size = 0x12000, scoped, tag = 'internal scratch']
  #allocation2 [shape = 'bf16[16,32]{1,0:T(16,128)(2,1)}', space=vmem, size = 0x1000, scoped, tag = 'scratch operand']
  #allocation3 [shape = 'f32[16,1]{1,0:T(8,128)}', space=vmem, size = 0x2000, scoped, tag = 'scratch operand']
  #allocation4 [shape = 'f32[16,1]{1,0:T(8,128)}', space=vmem, size = 0x2000, scoped, tag = 'scratch operand']
  %s0 = inlined_call_operand.hbm [shape: f32[32,32], index: 0, kind: input, shape index: {}]
  %s1 = inlined_call_operand.hbm [shape: bf16[32,256], index: 1, kind: input, shape index: {}]
  %s2 = inlined_call_operand.vmem [shape: f32[1,256], index: 2, kind: input, shape index: {}]
  %s3 = inlined_call_operand.hbm [shape: f32[32,256], index: 3, kind: output, shape index: {}]
  %s4 = sld [smem:[#allocation0]]
  $region61: #{tpu_custom_call.1} parent=0
    _
  %s6 = ssub.s32 1, %s4
  %s7 = scalar_select 0, %s6, %s4
  $region1: #{tpu_custom_call.1} parent=0
    #allocation5 [shape = 'u8[16384]{0}', space=vmem, size = 0x4000, scoped, tag = 'input window, operand 0']
    #allocation6 [shape = 's32[2]{0}', space=sflag, size = 0x8, scoped, tag = 'scoped memory for tpu_custom_call.1']
    #allocation7 [shape = 's32[2]{0}', space=sflag, size = 0x8, scoped, tag = 'scoped memory for tpu_custom_call.1']
    #allocation8 [shape = 'u8[16384]{0}', space=vmem, size = 0x4000, scoped, tag = 'input window, operand 1']
    #allocation9 [shape = 's32[2]{0}', space=sflag, size = 0x8, scoped, tag = 'scoped memory for tpu_custom_call.1']
    #allocation10 [shape = 'u8[32768]{0}', space=vmem, size = 0x8000, scoped, tag = 'output window, operand 0']
    %8 = vsyncpa [#allocation6], 0
    %s9 = scalar_lea.sflag [#allocation6], 1
    %10 = vsyncpa %s9, 0
    %11 = vsyncpa [#allocation9], 0
    %s12 = scalar_lea.sflag [#allocation9], 1
    %13 = vsyncpa %s12, 0
    %14 = vsyncpa [#allocation7], 0
    %s15 = scalar_lea.sflag [#allocation7], 1
    %16 = vsyncpa %s15, 0
    loop: start=0, step=1, limit=6
    $region2: #{tpu_custom_call.1} parent=1 // loop_pre_header
      _
    $region3: #{tpu_custom_call.1} parent=1 // loop_header
      %s18 = sphi 0, %s22
      %p19 = scmp.ge.s32.totalorder %s18, 6
      %s25 = sphi 0, %s37
      %s26 = sphi 0, %s33
      %s27 = sphi 0, %s25
      %s28 = sphi 0, %s26
      %s29 = sphi 0, %s27
      %s30 = sphi 0, %s28
      %s40 = sphi 0, %s42
      %s43 = sphi 0, %s40
      %s44 = sphi 0, %s43
      %s60 = sphi 0, %s44
      %s66 = sphi 0, %s68
      %s69 = sphi 0, %s66
      %s70 = sphi 0, %s69
      %s86 = sphi 0, %s70
      %s90 = sphi 0, %s90
      %s92 = sphi 0, %s90
      %s93 = sphi 0, %s92
      %s107 = sphi 0, %s93
      %s113 = sphi 0, %s115
      %s116 = sphi 0, %s113
      %s117 = sphi 0, %s116
      %s133 = sphi 0, %s117
    $region4: #{tpu_custom_call.1} parent=1 // loop_header_branch
      %21 = sbr.rel (%p19) target = $region8
    $region5: #{tpu_custom_call.1} parent=1 // loop_body
      %s23 = ssub.s32 %s18, 1
      %s24 = ssub.s32 %s18, 2
      %s31 = sadd.s32 1, %s26
      %p32 = scmp.ge.s32.totalorder %s31, 2
      %s33 = scalar_select %p32, 0, %s31
      %s34 = sadd.s32 1, %s25
      %s35 = scalar_select %p32, %s34, %s25
      %p36 = scmp.ge.s32.totalorder %s35, 2
      %s37 = scalar_select %p36, 0, %s35
      %s38 = ssub.s32 %s25, %s37
      %p39 = scmp.eq.s32.totalorder %s38, 0
      %s41 = sadd.s32 %s40, 1
      %s42 = scalar_select %p39, %s40, %s41
      %p45 = pneg %p39
      %p46 = scmp.eq.s32.totalorder %s18, 3
      %p47 = por %p45, %p46
      %p48 = scmp.ne.s32.totalorder %s40, %s43
      %p49 = scmp.eq.s32.totalorder %s18, 0
      %p50 = por %p48, %p49
      %p51 = scmp.ne.s32.totalorder %s40, %s43
      %p52 = scmp.eq.s32.totalorder %s23, 3
      %p53 = por %p51, %p52
      %p54 = scmp.ne.s32.totalorder %s43, %s44
      %p55 = scmp.eq.s32.totalorder %s23, 0
      %p56 = por %p54, %p55
      %p57 = scmp.ne.s32.totalorder %s43, %s44
      %p58 = scmp.eq.s32.totalorder %s24, 3
      %p59 = por %p57, %p58
      %p61 = scmp.ne.s32.totalorder %s44, %s60
      %p62 = scmp.eq.s32.totalorder %s24, 0
      %p63 = por %p61, %p62
      %s64 = ssub.s32 %s26, %s33
      %p65 = scmp.eq.s32.totalorder %s64, 0
      %s67 = sadd.s32 %s66, 1
      %s68 = scalar_select %p65, %s66, %s67
      %p71 = pneg %p65
      %p72 = scmp.eq.s32.totalorder %s18, 3
      %p73 = por %p71, %p72
      %p74 = scmp.ne.s32.totalorder %s66, %s69
      %p75 = scmp.eq.s32.totalorder %s18, 0
      %p76 = por %p74, %p75
      %p77 = scmp.ne.s32.totalorder %s66, %s69
      %p78 = scmp.eq.s32.totalorder %s23, 3
      %p79 = por %p77, %p78
      %p80 = scmp.ne.s32.totalorder %s69, %s70
      %p81 = scmp.eq.s32.totalorder %s23, 0
      %p82 = por %p80, %p81
      %p83 = scmp.ne.s32.totalorder %s69, %s70
      %p84 = scmp.eq.s32.totalorder %s24, 3
      %p85 = por %p83, %p84
      %p87 = scmp.ne.s32.totalorder %s70, %s86
      %p88 = scmp.eq.s32.totalorder %s24, 0
      %p89 = por %p87, %p88
      %s91 = sadd.s32 %s90, 1
      %p94 = scmp.eq.s32.totalorder %s18, 3
      %p95 = scmp.ne.s32.totalorder %s90, %s92
      %p96 = scmp.eq.s32.totalorder %s18, 0
      %p97 = por %p95, %p96
      %p98 = scmp.ne.s32.totalorder %s90, %s92
      %p99 = scmp.eq.s32.totalorder %s23, 3
      %p100 = por %p98, %p99
      %p101 = scmp.ne.s32.totalorder %s92, %s93
      %p102 = scmp.eq.s32.totalorder %s23, 0
      %p103 = por %p101, %p102
      %p104 = scmp.ne.s32.totalorder %s92, %s93
      %p105 = scmp.eq.s32.totalorder %s24, 3
      %p106 = por %p104, %p105
      %p108 = scmp.ne.s32.totalorder %s93, %s107
      %p109 = scmp.eq.s32.totalorder %s24, 0
      %p110 = por %p108, %p109
      %s111 = ssub.s32 %s25, %s37
      %p112 = scmp.eq.s32.totalorder %s111, 0
      %s114 = sadd.s32 %s113, 1
      %s115 = scalar_select %p112, %s113, %s114
      %p118 = pneg %p112
      %p119 = scmp.eq.s32.totalorder %s18, 3
      %p120 = por %p118, %p119
      %p121 = scmp.ne.s32.totalorder %s113, %s116
      %p122 = scmp.eq.s32.totalorder %s18, 0
      %p123 = por %p121, %p122
      %p124 = scmp.ne.s32.totalorder %s113, %s116
      %p125 = scmp.eq.s32.totalorder %s23, 3
      %p126 = por %p124, %p125
      %p127 = scmp.ne.s32.totalorder %s116, %s117
      %p128 = scmp.eq.s32.totalorder %s23, 0
      %p129 = por %p127, %p128
      %p130 = scmp.ne.s32.totalorder %s116, %s117
      %p131 = scmp.eq.s32.totalorder %s24, 3
      %p132 = por %p130, %p131
      %p134 = scmp.ne.s32.totalorder %s117, %s133
      %p135 = scmp.eq.s32.totalorder %s24, 0
      %p136 = por %p134, %p135
      %p137 = scmp.le.s32.totalorder 1, %s18
      %p138 = scmp.lt.s32.totalorder %s18, 5
      %p139 = pnand %p137, %p138
      %p140 = pneg %p139
      // Predicated region
      $region9: #{tpu_custom_call.1} parent=5 // pred_check
        _
      $region10: #{tpu_custom_call.1} parent=5 // pred_check_branch
        %142 = sbr.rel (%p139) target = $region12
      $region11: #{tpu_custom_call.1} parent=5 // pred_region
        %s143 = ssub.s32 %s18, 1
        // Predicated region
        $region13: #{tpu_custom_call.1} parent=11 // pred_check
          %p144 = pneg %p103
        $region14: #{tpu_custom_call.1} parent=11 // pred_check_branch
          %146 = sbr.rel (%p144) target = $region16
        $region15: #{tpu_custom_call.1} parent=11 // pred_region
          _
        $region16: #{tpu_custom_call.1} parent=11 // pred_fallthru
          _
      $region12: #{tpu_custom_call.1} parent=5 // pred_fallthru
        _
      %p147 = scmp.lt.s32.totalorder %s18, 4
      // Predicated region
      $region17: #{tpu_custom_call.1} parent=5 // pred_check
        %p148 = pneg %p147
      $region18: #{tpu_custom_call.1} parent=5 // pred_check_branch
        %150 = sbr.rel (%p148) target = $region20
      $region19: #{tpu_custom_call.1} parent=5 // pred_region
        // Predicated region
        $region21: #{tpu_custom_call.1} parent=19 // pred_check
          %p151 = pneg %p50
        $region22: #{tpu_custom_call.1} parent=19 // pred_check_branch
          %153 = sbr.rel (%p151) target = $region24
        $region23: #{tpu_custom_call.1} parent=19 // pred_region
          %s154 = sand.u32 %s40, 1
          %s155 = scalar_lea.sflag [#allocation6], %s154
          %s156 = sand.u32 %s40, 1
          %s157 = smul.addr %s156, 16
          %s158 = scalar_lea.vmem [#allocation5], %s157
          %s159 = smul.u32 2, %s25
          %s161 = ssub.s32 256, 256
          %162 = vsyncadd %s155, %s161
          %s163 = smul.addr %s159, 128
          %s164 = scalar_lea.hbm %s0, %s163
          %s165 = sshll.u32 %s158, 4
          %s166 = int_to_ptr.vmem [resolvable:$true] %s165
          %171 = dma.hbm_to_vmem [thread:$0]  %s164, 256, %s166, %s155, 128, 128, 8
        $region24: #{tpu_custom_call.1} parent=19 // pred_fallthru
          _
        // Predicated region
        $region25: #{tpu_custom_call.1} parent=19 // pred_check
          %p172 = pneg %p76
        $region26: #{tpu_custom_call.1} parent=19 // pred_check_branch
          %174 = sbr.rel (%p172) target = $region28
        $region27: #{tpu_custom_call.1} parent=19 // pred_region
          %s175 = sand.u32 %s66, 1
          %s176 = scalar_lea.sflag [#allocation9], %s175
          %s177 = sand.u32 %s66, 1
          %s178 = smul.addr %s177, 16
          %s179 = scalar_lea.vmem [#allocation8], %s178
          %s181 = ssub.s32 256, 256
          %182 = vsyncadd %s176, %s181
          %s183 = smul.addr %s26, 64
          %s184 = scalar_lea.hbm %s1, %s183
          %s185 = sshll.u32 %s179, 4
          %s186 = int_to_ptr.vmem [resolvable:$true] %s185
          %191 = dma.hbm_to_vmem [thread:$0]  %s184, 256, %s186, %s176, 128, 64, 4
        $region28: #{tpu_custom_call.1} parent=19 // pred_fallthru
          _
      $region20: #{tpu_custom_call.1} parent=5 // pred_fallthru
        _
      %p192 = scmp.le.s32.totalorder 1, %s18
      %p193 = scmp.lt.s32.totalorder %s18, 5
      %p194 = pnand %p192, %p193
      %p195 = pneg %p194
      // Predicated region
      $region29: #{tpu_custom_call.1} parent=5 // pred_check
        _
      $region30: #{tpu_custom_call.1} parent=5 // pred_check_branch
        %197 = sbr.rel (%p194) target = $region32
      $region31: #{tpu_custom_call.1} parent=5 // pred_region
        %s198 = ssub.s32 %s18, 1
        %s199 = sand.u32 %s43, 1
        %s200 = scalar_lea.sflag [#allocation6], %s199
        %s201 = sand.u32 %s43, 1
        %s202 = smul.addr %s201, 16
        %s203 = scalar_lea.vmem [#allocation5], %s202
        // Predicated region
        $region33: #{tpu_custom_call.1} parent=31 // pred_check
          %p204 = pneg %p56
        $region34: #{tpu_custom_call.1} parent=31 // pred_check_branch
          %206 = sbr.rel (%p204) target = $region36
        $region35: #{tpu_custom_call.1} parent=31 // pred_region
          %207 = dma.done %s200, 256
        $region36: #{tpu_custom_call.1} parent=31 // pred_fallthru
          _
        %s208 = sand.u32 %s69, 1
        %s209 = scalar_lea.sflag [#allocation9], %s208
        %s210 = sand.u32 %s69, 1
        %s211 = smul.addr %s210, 16
        %s212 = scalar_lea.vmem [#allocation8], %s211
        // Predicated region
        $region37: #{tpu_custom_call.1} parent=31 // pred_check
          %p213 = pneg %p82
        $region38: #{tpu_custom_call.1} parent=31 // pred_check_branch
          %215 = sbr.rel (%p213) target = $region40
        $region39: #{tpu_custom_call.1} parent=31 // pred_region
          %216 = dma.done %s209, 256
        $region40: #{tpu_custom_call.1} parent=31 // pred_fallthru
          _
        %s217 = sand.u32 %s43, 1
        %s218 = scalar_lea.sflag [#allocation6], %s217
        %s219 = sand.u32 %s43, 1
        %s220 = smul.addr %s219, 16
        %s221 = scalar_lea.vmem [#allocation5], %s220
        %p222 = pneg %p56
        %p223 = pneg %p53
        %s224 = sand.u32 %s69, 1
        %s225 = scalar_lea.sflag [#allocation9], %s224
        %s226 = sand.u32 %s69, 1
        %s227 = smul.addr %s226, 16
        %s228 = scalar_lea.vmem [#allocation8], %s227
        %p229 = pneg %p82
        %p230 = pneg %p79
        %p231 = pneg %p103
        %p232 = pneg %p100
        %p233 = pneg %p129
        %p234 = pneg %p126
        %s235 = sand.u32 %s116, 1
        %s236 = scalar_lea.sflag [#allocation7], %s235
        %s237 = sand.u32 %s116, 1
        %s238 = smul.addr %s237, 32
        %s239 = scalar_lea.vmem [#allocation10], %s238
        %s240 = smul.u32 2, %s27
        %s241 = smul.u32 2, %s27
        %p243 = scmp.eq.s32.totalorder %s28, 0
        // Predicated region
        $region41: #{tpu_custom_call.1} parent=31 // pred_check
          %p244 = pneg %p243
        $region42: #{tpu_custom_call.1} parent=31 // pred_check_branch
          %246 = sbr.rel (%p244) target = $region44
        $region43: #{tpu_custom_call.1} parent=31 // pred_region
          %v247 = vld [vmem:[%s203] sm:$0xff]
          %v248 = vld [vmem:[%s203 + $0x8] sm:$0xff]
          %vm249 = vcmask 261120
          %v250 = vsel %vm249, %v247, 0.0
          %251 = vadd.xlane.f32.xlu0 %v250
          %v252 = vpop.xlane.xlu0 %251
          %v253 = vsel %vm249, %v248, 0.0
          %254 = vadd.xlane.f32.xlu0 %v253
          %v255 = vpop.xlane.xlu0 %254
          %v256 = vrcp.pop 32.0
          %v257 = vmul.f32 %v252, %v256
          %v258 = vmul.f32 %v255, %v256
          %v259 = vsub.f32 %v247, %v257
          %v260 = vsub.f32 %v248, %v258
          %v261 = vmul.f32 %v259, %v259
          %v262 = vmul.f32 %v260, %v260
          %v263 = vsel %vm249, %v261, 0.0
          %264 = vadd.xlane.f32.xlu0 %v263
          %v265 = vpop.xlane.xlu0 %264
          %v266 = vsel %vm249, %v262, 0.0
          %267 = vadd.xlane.f32.xlu0 %v266
          %v268 = vpop.xlane.xlu0 %267
          %v269 = vmul.f32 %v265, %v256
          %v270 = vmul.f32 %v268, %v256
          %v271 = vadd.f32 %v269, 1e-05
          %v272 = vadd.f32 %v270, 1e-05
          %v273 = vrsqrt.pop %v271
          %v274 = vrsqrt.pop %v272
          %v275 = vmul.f32 %v259, %v273
          %v276 = vmul.f32 %v260, %v274
          %v277 = vpack.c.bf16 %v276, %v275
          %278 = vst.msk [vmem:[#allocation2] sm:$0xff] %vm249, %v277
          %vm279 = vcmask 7168
          %280 = vst.msk [vmem:[#allocation3] sm:$0xff] %vm279, -inf
          %281 = vst.msk [vmem:[#allocation3 + $0x8] sm:$0xff] %vm279, -inf
          %282 = vst.msk [vmem:[#allocation4] sm:$0xff] %vm279, 0.0
          %283 = vst.msk [vmem:[#allocation4 + $0x8] sm:$0xff] %vm279, 0.0
        $region44: #{tpu_custom_call.1} parent=31 // pred_fallthru
          _
        %s284 = smul.u32 %s28, 128
        %v285 = vld [vmem:[#allocation2] sm:$0xff]
        %v286 = vld [vmem:[%s212] sm:$0xf]
        %v287 = vld [vmem:[%s212 + $0x4] sm:$0xf]
        %v288 = vld [vmem:[%s212 + $0x8] sm:$0xf]
        %v289 = vld [vmem:[%s212 + $0xc] sm:$0xf]
        %s290 = sshra.s32 %s284, 7
        %s291 = sand.u32 %s284, 127
        %s292 = scalar_lea.vmem %s2, %s290
        %v293 = vld [vmem:[%s292] sm:$0x1]
        %v295 = vlaneseq
        %v296 = vshrl.u32 %v295, 7
        %v297 = vsub.s32 0, %v296
        %v298 = vrot.slane %v293, %v297
        %v304 = vunpack.c.l.b16 %v286
        %v305 = vunpack.c.l.b16 %v287
        %v306 = vunpack.c.l.b16 %v288
        %v307 = vunpack.c.l.b16 %v289
        %v308 = vpack.c.b16 %v305, %v304
        %v309 = vpack.c.b16 %v307, %v306
        %vm312 = vcmask 261120
        %v314 = vsel %vm312, %v285, 0
        %316 = vmatprep.subr.bf16.mxu0 0
        %317 = vmatpush1.bf16.msra.mxu0 %v308
        %318 = vmatprep.subr.bf16.mxu0 0
        %319 = vmatpush1.bf16.msra.mxu0 %v309
        %320 = vmatprep.subr.bf16.mxu0 0
        %321 = vmatpush1.bf16.msra.mxu0 0
        %322 = vmatprep.subr.bf16.mxu0 0
        %323 = vmatpush1.bf16.msra.mxu0 0
        %324 = vmatprep.subr.bf16.mxu0 0
        %325 = vmatpush1.bf16.msra.mxu0 0
        %326 = vmatprep.subr.bf16.mxu0 0
        %327 = vmatpush1.bf16.msra.mxu0 0
        %328 = vmatprep.subr.bf16.mxu0 0
        %329 = vmatpush1.bf16.msra.mxu0 0
        %330 = vmatprep.subr.bf16.mxu0 0
        %331 = vmatpush1.bf16.msra.mxu0 0
        %332 = vmatprep.subr.bf16.mxu0 0
        %333 = vmatpush1.bf16.msra.mxu0 0
        %334 = vmatprep.subr.bf16.mxu0 0
        %335 = vmatpush1.bf16.msra.mxu0 0
        %336 = vmatprep.subr.bf16.mxu0 0
        %337 = vmatpush1.bf16.msra.mxu0 0
        %338 = vmatprep.subr.bf16.mxu0 0
        %339 = vmatpush1.bf16.msra.mxu0 0
        %340 = vmatprep.subr.bf16.mxu0 0
        %341 = vmatpush1.bf16.msra.mxu0 0
        %342 = vmatprep.subr.bf16.mxu0 0
        %343 = vmatpush1.bf16.msra.mxu0 0
        %344 = vmatprep.subr.bf16.mxu0 0
        %345 = vmatpush1.bf16.msra.mxu0 0
        %346 = vmatprep.subr.bf16.mxu0 0
        %347 = vmatpush1.bf16.msra.mxu0 0
        %348 = vmatprep.mubr.bf16.mxu0 0
        %349 = vmatmul.mubr.bf16.gmra.mrb[0].mxu0 %v314
        %v350 = vpop.f32.mrb[0].mxu0
        %v351 = vadd.f32 %v298, %v350
        %v352 = vpop.f32.mrb[0].mxu0
        %v353 = vpop.f32.mrb[0].mxu0
        %v354 = vadd.f32 %v298, %v353
        %v355 = vpop.f32.mrb[0].mxu0
        %356 = vdwg.mxu0
        %s357 = smul.addr %s290, 8
        %s358 = scalar_lea.vmem %s239, %s357 [#allocation10]
        %359 = vst [vmem:[%s358] sm:$0xff] %v351
        %360 = vst [vmem:[%s358 + $0x10] sm:$0xff] %v354
        %v361 = vld [vmem:[#allocation3] sm:$0xff]
        %v362 = vld [vmem:[#allocation3 + $0x8] sm:$0xff]
        %363 = vmax.xlane.f32.xlu0 %v351
        %v364 = vpop.xlane.xlu0 %363
        %365 = vmax.xlane.f32.xlu0 %v354
        %v366 = vpop.xlane.xlu0 %365
        %v367 = vmax.f32 %v361, %v364
        %v368 = vmax.f32 %v362, %v366
        %v369 = vld [vmem:[#allocation4] sm:$0xff]
        %v370 = vld [vmem:[#allocation4 + $0x8] sm:$0xff]
        %v371 = vsub.f32 %v361, %v367
        %v372 = vsub.f32 %v362, %v368
        %v373 = vmul.f32 %v371, 1.442695
        %v374 = vpow.pop %v373
        %v375 = vmul.f32 %v372, 1.442695
        %v376 = vpow.pop %v375
        %v377 = vmul.f32 %v369, %v374
        %v378 = vmul.f32 %v370, %v376
        %380 = vset.pattern.permute.xlu0 0
        %381 = vperm.xlu0 %380, %v367
        %v382 = vpop.permute.xlu0 %381
        %385 = vset.pattern.permute.xlu0 0
        %386 = vperm.xlu0 %385, %v368
        %v387 = vpop.permute.xlu0 %386
        %v389 = vsub.f32 %v351, %v382
        %v390 = vsub.f32 %v354, %v387
        %v391 = vmul.f32 %v389, 1.442695
        %v392 = vpow.pop %v391
        %v393 = vmul.f32 %v390, 1.442695
        %v394 = vpow.pop %v393
        %395 = vadd.xlane.f32.xlu0 %v392
        %v396 = vpop.xlane.xlu0 %395
        %397 = vadd.xlane.f32.xlu0 %v394
        %v398 = vpop.xlane.xlu0 %397
        %v399 = vadd.f32 %v377, %v396
        %v400 = vadd.f32 %v378, %v398
        %vm401 = vcmask 7168
        %402 = vst.msk [vmem:[#allocation4] sm:$0xff] %vm401, %v399
        %403 = vst.msk [vmem:[#allocation4 + $0x8] sm:$0xff] %vm401, %v400
        %404 = vst.msk [vmem:[#allocation3] sm:$0xff] %vm401, %v367
        %405 = vst.msk [vmem:[#allocation3 + $0x8] sm:$0xff] %vm401, %v368
        %p406 = scmp.eq.s32.totalorder %s28, 1
        // Predicated region
        $region45: #{tpu_custom_call.1} parent=31 // pred_check
          %p407 = pneg %p406
        $region46: #{tpu_custom_call.1} parent=31 // pred_check_branch
          %409 = sbr.rel (%p407) target = $region48
        $region47: #{tpu_custom_call.1} parent=31 // pred_region
          %v410 = vld [vmem:[#allocation3] sm:$0xff]
          %v411 = vld [vmem:[#allocation3 + $0x8] sm:$0xff]
          %v412 = vld [vmem:[#allocation4] sm:$0xff]
          %v413 = vld [vmem:[#allocation4 + $0x8] sm:$0xff]
          %v414 = vlog2.pop %v412
          %v415 = vmul.f32 %v414, 0.6931472
          %v416 = vlog2.pop %v413
          %v417 = vmul.f32 %v416, 0.6931472
          %v418 = vadd.f32 %v410, %v415
          %v419 = vadd.f32 %v411, %v417
          %v420 = vld [vmem:[%s239] sm:$0xff]
          %v421 = vld [vmem:[%s239 + $0x8] sm:$0xff]
          %v422 = vld [vmem:[%s239 + $0x10] sm:$0xff]
          %v423 = vld [vmem:[%s239 + $0x18] sm:$0xff]
          %425 = vset.pattern.permute.xlu0 0
          %426 = vperm.xlu0 %425, %v418
          %v427 = vpop.permute.xlu0 %426
          %430 = vset.pattern.permute.xlu0 0
          %431 = vperm.xlu0 %430, %v419
          %v432 = vpop.permute.xlu0 %431
          %v434 = vsub.f32 %v420, %v427
          %v435 = vsub.f32 %v421, %v427
          %v436 = vsub.f32 %v422, %v432
          %v437 = vsub.f32 %v423, %v432
          %438 = vst [vmem:[%s239] sm:$0xff] %v434
          %439 = vst [vmem:[%s239 + $0x8] sm:$0xff] %v435
          %440 = vst [vmem:[%s239 + $0x10] sm:$0xff] %v436
          %441 = vst [vmem:[%s239 + $0x18] sm:$0xff] %v437
        $region48: #{tpu_custom_call.1} parent=31 // pred_fallthru
          _
        %s442 = sand.u32 %s116, 1
        %s443 = scalar_lea.sflag [#allocation7], %s442
        %s444 = sand.u32 %s116, 1
        %s445 = smul.addr %s444, 32
        %s446 = scalar_lea.vmem [#allocation10], %s445
        // Predicated region
        $region49: #{tpu_custom_call.1} parent=31 // pred_check
          %p447 = pneg %p126
        $region50: #{tpu_custom_call.1} parent=31 // pred_check_branch
          %449 = sbr.rel (%p447) target = $region52
        $region51: #{tpu_custom_call.1} parent=31 // pred_region
          %s450 = smul.u32 2, %s27
          %s452 = ssub.s32 512, 512
          %453 = vsyncadd %s443, %s452
          %s454 = smul.addr %s450, 2
          %s455 = smul.addr %s454, 128
          %s456 = scalar_lea.hbm %s3, %s455
          %s457 = sshll.u32 %s446, 4
          %s458 = int_to_ptr.vmem [resolvable:$true] %s457
          %463 = dma.vmem_to_hbm [thread:$0]  %s458, 512, %s456, %s443, 256, 256, 16
        $region52: #{tpu_custom_call.1} parent=31 // pred_fallthru
          _
      $region32: #{tpu_custom_call.1} parent=5 // pred_fallthru
        _
      %p464 = scmp.le.s32.totalorder 2, %s18
      // Predicated region
      $region53: #{tpu_custom_call.1} parent=5 // pred_check
        %p465 = pneg %p464
      $region54: #{tpu_custom_call.1} parent=5 // pred_check_branch
        %467 = sbr.rel (%p465) target = $region56
      $region55: #{tpu_custom_call.1} parent=5 // pred_region
        %s468 = ssub.s32 %s18, 2
        // Predicated region
        $region57: #{tpu_custom_call.1} parent=55 // pred_check
          %p469 = pneg %p132
        $region58: #{tpu_custom_call.1} parent=55 // pred_check_branch
          %471 = sbr.rel (%p469) target = $region60
        $region59: #{tpu_custom_call.1} parent=55 // pred_region
          %s472 = sand.u32 %s117, 1
          %s473 = scalar_lea.sflag [#allocation7], %s472
          %s474 = sand.u32 %s117, 1
          %s475 = smul.addr %s474, 32
          %s476 = scalar_lea.vmem [#allocation10], %s475
          %477 = dma.done %s473, 512
        $region60: #{tpu_custom_call.1} parent=55 // pred_fallthru
          _
      $region56: #{tpu_custom_call.1} parent=5 // pred_fallthru
        _
    $region6: #{tpu_custom_call.1} parent=1 // loop_footer
      %s22 = sadd.s32 1, %s18
    $region7: #{tpu_custom_call.1} parent=1 // loop_footer_branch
      %17 = sbr.rel target = $region3
    $region8: #{tpu_custom_call.1} parent=1 // loop_exit
      _
    %478 = vsyncpa [#allocation6], 1
    %s479 = scalar_lea.sflag [#allocation6], 1
    %480 = vsyncpa %s479, 1
    %481 = vsyncpa [#allocation9], 1
    %s482 = scalar_lea.sflag [#allocation9], 1
    %483 = vsyncpa %s482, 1
    %484 = vsyncpa [#allocation7], 1
    %s485 = scalar_lea.sflag [#allocation7], 1
    %486 = vsyncpa %s485, 1

</llo_original>
